<compile_context>
chip_gen: v5e
topology: v5e:2x2
jax: 0.10.0
libtpu: 0.0.40
codegen_flags: <defaults>
</compile_context>

<pallas_src>
import functools

import jax
import jax.numpy as jnp
from jax.experimental import pallas as pl
from jax.experimental.pallas import tpu as pltpu


# Tables at or below this size take the whole-table-in-VMEM one-hot-matmul path.
_VMEM_TABLE_BYTES_MAX = 2 * 1024 * 1024


# ----------------------------------------------------------------------------------
# Path 1: small table — full table in VMEM, one-hot gather on the MXU.
# ----------------------------------------------------------------------------------
def _one_hot_gather_kernel(labels_ref, table_ref, out_ref):
    """out[i] = table[labels[i]] via (tb, rows) one-hot @ (rows, hidden) on the MXU."""
    labels = labels_ref[...]                                        # (tb, 1) int32
    tb = labels.shape[0]
    rows = table_ref.shape[0]
    row_ids = jax.lax.broadcasted_iota(jnp.int32, (tb, rows), 1)    # (tb, rows)
    one_hot = (row_ids == labels).astype(table_ref.dtype)           # (tb, rows)
    # HIGHEST precision so the gathered f32 rows come back (essentially) bit-exact
    # instead of bf16-rounded by the default MXU pass.
    out_ref[...] = jnp.dot(
        one_hot, table_ref[...],
        preferred_element_type=jnp.float32,
        precision=jax.lax.Precision.HIGHEST,
    ).astype(out_ref.dtype)


def _label_embedding_vmem(eff_labels, table, *, batch_tile=512):
    batch = eff_labels.shape[0]
    rows, hidden = table.shape
    tb = batch if batch <= batch_tile else batch_tile
    grid = (pl.cdiv(batch, tb),)
    dtype_bytes = jnp.dtype(table.dtype).itemsize

    return pl.pallas_call(
        _one_hot_gather_kernel,
        out_shape=jax.ShapeDtypeStruct((batch, hidden), table.dtype),
        grid=grid,
        in_specs=[
            pl.BlockSpec((tb, 1), lambda i: (i, 0)),            # labels tile
            pl.BlockSpec((rows, hidden), lambda i: (0, 0)),     # whole table, reused
        ],
        out_specs=pl.BlockSpec((tb, hidden), lambda i: (i, 0)),
        compiler_params=pltpu.CompilerParams(
            dimension_semantics=("parallel",)),
        cost_estimate=pl.CostEstimate(
            flops=2 * batch * rows * hidden,
            transcendentals=0,
            bytes_accessed=(rows * hidden + 2 * batch * hidden) * dtype_bytes),
    )(eff_labels.reshape(batch, 1), table)


# ----------------------------------------------------------------------------------
# Path 2: large table — HBM-resident table, direct HBM->HBM per-row DMA gather.
# ----------------------------------------------------------------------------------
def _dma_gather_kernel(eff_labels_ref, table_hbm, out_hbm, sem, *, batch, unroll):
    """Row-gather from an HBM table straight into the HBM output via async DMAs.

    eff_labels_ref : SMEM (batch,) int32    (scalar-prefetch; drop already folded in)
    table_hbm      : HBM  (rows, hidden)    (memory_space=pl.ANY)
    out_hbm        : HBM  (batch, hidden)   (memory_space=pl.ANY)
    sem            : single shared DMA semaphore, shape (1,)
    """

    def issue(i, carry):
        lab = eff_labels_ref[i]
        pltpu.make_async_copy(
            table_hbm.at[pl.ds(lab, 1), :],   # one (1, hidden) row in the HBM table
            out_hbm.at[pl.ds(i, 1), :],       # matching (1, hidden) row in HBM output
            sem.at[0],
        ).start()
        return carry

    # Issue all row copies first — they overlap on the DMA engines.
    jax.lax.fori_loop(0, batch, issue, 0, unroll=unroll)

    def drain(i, carry):
        # The wait only needs the per-copy size + the shared semaphore; every issued
        # copy is an identical (1, hidden) row, so `batch` such waits drain the
        # semaphore exactly, independent of completion order.
        pltpu.make_async_copy(
            table_hbm.at[pl.ds(0, 1), :],
            out_hbm.at[pl.ds(0, 1), :],
            sem.at[0],
        ).wait()
        return carry

    jax.lax.fori_loop(0, batch, drain, 0, unroll=unroll)


def _label_embedding_dma(eff_labels, table):
    batch = eff_labels.shape[0]
    rows, hidden = table.shape
    dtype_bytes = jnp.dtype(table.dtype).itemsize
    kernel = functools.partial(
        _dma_gather_kernel, batch=batch, unroll=min(batch, 8))

    return pl.pallas_call(
        kernel,
        out_shape=jax.ShapeDtypeStruct((batch, hidden), table.dtype),
        grid_spec=pltpu.PrefetchScalarGridSpec(
            num_scalar_prefetch=1,                      # eff_labels -> SMEM
            grid=(1,),
            in_specs=[pl.BlockSpec(memory_space=pl.ANY)],   # table stays in HBM
            out_specs=pl.BlockSpec(memory_space=pl.ANY),    # rows land directly in HBM
            scratch_shapes=[pltpu.SemaphoreType.DMA((1,))],  # one shared semaphore
        ),
        compiler_params=pltpu.CompilerParams(
            dimension_semantics=("arbitrary",)),
        cost_estimate=pl.CostEstimate(
            flops=0, transcendentals=0,
            bytes_accessed=2 * batch * hidden * dtype_bytes),
    )(eff_labels, table)


# ----------------------------------------------------------------------------------
# Wrapper matching LabelEmbedding.forward (eval & force_drop paths).
# ----------------------------------------------------------------------------------
def label_embedding(labels, table, num_classes, dropout_prob=0.0,
                    force_drop_ids=None, training=False, rng_key=None,
                    gather_impl="auto"):
    batch = labels.shape[0]
    rows, hidden = table.shape
    labels = labels.astype(jnp.int32)

    # --- fold token_drop() into the effective label (cheap batch-length glue) ---
    if force_drop_ids is not None:
        eff = jnp.where(force_drop_ids == 1, jnp.int32(num_classes), labels)
    elif training and dropout_prob > 0:
        # TODO(synk): torch.rand-driven drop emulated with jax.random (distributionally
        # equivalent, not bitwise-identical to the PyTorch module).
        assert rng_key is not None
        drop = jax.random.uniform(rng_key, (batch,)) < dropout_prob
        eff = jnp.where(drop, jnp.int32(num_classes), labels)
    else:
        eff = labels
    # Clamp so a bad label can never become an OOB HBM row DMA (no runtime check).
    eff = jnp.clip(eff, 0, rows - 1).astype(jnp.int32)

    table_bytes = rows * hidden * jnp.dtype(table.dtype).itemsize
    if gather_impl == "auto":
        gather_impl = "vmem" if table_bytes <= _VMEM_TABLE_BYTES_MAX else "dma"

    if gather_impl == "vmem":
        return _label_embedding_vmem(eff, table)
    return _label_embedding_dma(eff, table)


if __name__ == "__main__":
    # Module config (small, consistent with the PyTorch module's __init__).
    num_classes = 10
    hidden_size = 128          # multiple of 128 -> lane-dense, unmasked stores
    dropout_prob = 0.1         # > 0 -> table has an extra "null class" row
    batch = 8

    key = jax.random.PRNGKey(0)
    k_table, k_labels, k_drop, k_big = jax.random.split(key, 4)

    # nn.Embedding default init ~ N(0, 1); deterministic synthetic weights.
    table = jax.random.normal(
        k_table, (num_classes + 1, hidden_size), dtype=jnp.float32)
    labels = jax.random.randint(k_labels, (batch,), 0, num_classes, dtype=jnp.int32)
    force_drop_ids = jax.random.randint(k_drop, (batch,), 0, 2, dtype=jnp.int32)

    # ---- 1) eval-mode forward (small table -> whole-table-in-VMEM one-hot path) ----
    out = jax.block_until_ready(
        label_embedding(labels, table, num_classes, dropout_prob))
    ref = jnp.take(table, labels, axis=0)
    assert jnp.allclose(out, ref, atol=1e-5), "eval-mode embedding mismatch"

    # ---- 2) forward with force_drop_ids (classifier-free guidance) ----
    out_drop = jax.block_until_ready(
        label_embedding(labels, table, num_classes, dropout_prob,
                        force_drop_ids=force_drop_ids))
    dropped_labels = jnp.where(force_drop_ids == 1, num_classes, labels)
    ref_drop = jnp.take(table, dropped_labels, axis=0)
    assert jnp.allclose(out_drop, ref_drop, atol=1e-5), "force-drop embedding mismatch"

    # ---- 3) large-table configuration -> HBM->HBM per-row DMA gather path ----
    big_classes, big_hidden, big_batch = 1000, 256, 40
    kb_t, kb_l = jax.random.split(k_big)
    big_table = jax.random.normal(
        kb_t, (big_classes + 1, big_hidden), dtype=jnp.float32)
    big_labels = jax.random.randint(
        kb_l, (big_batch,), 0, big_classes, dtype=jnp.int32)
    out_big = jax.block_until_ready(
        label_embedding(big_labels, big_table, big_classes, dropout_prob,
                        gather_impl="dma"))
    ref_big = jnp.take(big_table, big_labels, axis=0)
    assert jnp.allclose(out_big, ref_big), "dma-path embedding mismatch"

    print("KERNEL_OK")
</pallas_src>

<mosaic_0001>
module attributes {stable_mosaic.version = 11 : i64} {
  func.func @_one_hot_gather_kernel(%arg0: i32, %arg1: memref<8x1xi32, #tpu.memory_space<vmem>>, %arg2: memref<11x128xf32, #tpu.memory_space<vmem>>, %arg3: memref<8x128xf32, #tpu.memory_space<vmem>>) attributes {dimension_semantics = [#tpu.dimension_semantics<parallel>], iteration_bounds = array<i64: 1>, scalar_prefetch = 0 : i64, scratch_operands = 0 : i64, tpu.core_type = #tpu.core_type<tc>, window_params = [{transform_indices = @transform_0, window_bounds = array<i64: 8, 1>}, {pipeline_mode = #tpu.pipeline_mode<synchronous>, transform_indices = @transform_1, window_bounds = array<i64: 11, 128>}, {transform_indices = @transform_2, window_bounds = array<i64: 8, 128>}]} {
    %c0 = arith.constant 0 : index
    %c0_0 = arith.constant 0 : index
    %0 = vector.load %arg1[%c0, %c0_0] : memref<8x1xi32, #tpu.memory_space<vmem>>, vector<8x1xi32>
    %1 = tpu.iota {dimensions = array<i32: 1>} : vector<8x11xi32>
    %2 = vector.broadcast %0 : vector<8x1xi32> to vector<8x11xi32>
    %3 = arith.cmpi eq, %1, %2 : vector<8x11xi32>
    %4 = arith.extui %3 : vector<8x11xi1> to vector<8x11xi32>
    %5 = arith.sitofp %4 : vector<8x11xi32> to vector<8x11xf32>
    %c0_1 = arith.constant 0 : index
    %c0_2 = arith.constant 0 : index
    %6 = vector.load %arg2[%c0_1, %c0_2] : memref<11x128xf32, #tpu.memory_space<vmem>>, vector<11x128xf32>
    %cst = arith.constant dense<0.000000e+00> : vector<8x128xf32>
    %7 = tpu.matmul %5, %6, %cst {dimension_numbers = #tpu.dot_dimension_numbers<[1], [0], [0], [1], [0, 0, 1, 1], [], []>, precision = #tpu.contract_precision<fp32>} : vector<8x11xf32>, vector<11x128xf32>, vector<8x128xf32> -> vector<8x128xf32>
    %c0_3 = arith.constant 0 : index
    %c0_4 = arith.constant 0 : index
    %8 = vector.load %arg3[%c0_3, %c0_4] : memref<8x128xf32, #tpu.memory_space<vmem>>, vector<8x128xf32>
    tpu.vector_store %arg3[%c0_3, %c0_4], %7 {strides = array<i32>} : memref<8x128xf32, #tpu.memory_space<vmem>>, vector<8x128xf32>,
    return
  }
  func.func @transform_0(%arg0: i32) -> (i32, i32) {
    %c0_i32 = arith.constant 0 : i32
    %c0_i32_0 = arith.constant 0 : i32
    return %arg0, %c0_i32 : i32, i32
  }
  func.func @transform_1(%arg0: i32) -> (i32, i32) {
    %c0_i32 = arith.constant 0 : i32
    %c0_i32_0 = arith.constant 0 : i32
    %c0_i32_1 = arith.constant 0 : i32
    return %c0_i32, %c0_i32_0 : i32, i32
  }
  func.func @transform_2(%arg0: i32) -> (i32, i32) {
    %c0_i32 = arith.constant 0 : i32
    %c0_i32_0 = arith.constant 0 : i32
    return %arg0, %c0_i32 : i32, i32
  }
}

</mosaic_0001>

<llo_original>
// kernel: tpu_custom_call.1
$region0: #{tpu_custom_call.1}
  #allocation0 [shape = 'u32[]', space=smem, size = 0x4, offset = 0x4, fixed_abs, tag = 'smem constant byte address 0x4 - core index']
  #allocation1 [shape = 'u32[72,128]{1,0:T(1,128)}', space=vmem, size = 0x9000, scoped, tag = 'internal scratch']
  %s0 = inlined_call_operand.vmem [shape: s32[8,1], index: 0, kind: input, shape index: {}]
  %s1 = inlined_call_operand.hbm [shape: f32[11,128], index: 1, kind: input, shape index: {}]
  %s2 = inlined_call_operand.hbm [shape: f32[8,128], index: 2, kind: output, shape index: {}]
  %s3 = sld [smem:[#allocation0]]
  $region22: #{tpu_custom_call.1} parent=0
    _
  %s5 = ssub.s32 1, %s3
  %s6 = scalar_select 0, %s5, %s3
  $region1: #{tpu_custom_call.1} parent=0
    #allocation2 [shape = 'u8[8192]{0}', space=vmem, size = 0x2000, scoped, tag = 'input window, operand 1, single buffered']
    #allocation3 [shape = 's32[1]{0}', space=sflag, size = 0x4, scoped, tag = 'scoped memory for tpu_custom_call.1']
    #allocation4 [shape = 's32[1]{0}', space=sflag, size = 0x4, scoped, tag = 'scoped memory for tpu_custom_call.1']
    #allocation5 [shape = 'u8[4096]{0}', space=vmem, size = 0x1000, scoped, tag = 'output window, operand 0, single buffered']
    %7 = vsyncpa [#allocation3], 0
    %8 = vsyncpa [#allocation4], 0
    // Predicated region
    $region2: #{tpu_custom_call.1} parent=1 // pred_check
      _
    $region3: #{tpu_custom_call.1} parent=1 // pred_check_branch
      %10 = sbr.rel (0) target = $region5
    $region4: #{tpu_custom_call.1} parent=1 // pred_region
      _
    $region5: #{tpu_custom_call.1} parent=1 // pred_fallthru
      _
    // Predicated region
    $region6: #{tpu_custom_call.1} parent=1 // pred_check
      _
    $region7: #{tpu_custom_call.1} parent=1 // pred_check_branch
      %12 = sbr.rel (0) target = $region9
    $region8: #{tpu_custom_call.1} parent=1 // pred_region
      %14 = vsyncadd [#allocation3], 0
      %s15 = sshll.u32 %s1, 4
      %s16 = int_to_ptr.hbm [resolvable:$true] %s15
      %s17 = sshll.u32 [#allocation2], 4
      %s18 = int_to_ptr.vmem [resolvable:$true] %s17
      %23 = dma.hbm_to_vmem [thread:$0]  %s16, 256, %s18, [#allocation3], 128, 128, 8
    $region9: #{tpu_custom_call.1} parent=1 // pred_fallthru
      _
    // Predicated region
    $region10: #{tpu_custom_call.1} parent=1 // pred_check
      _
    $region11: #{tpu_custom_call.1} parent=1 // pred_check_branch
      %25 = sbr.rel (0) target = $region13
    $region12: #{tpu_custom_call.1} parent=1 // pred_region
      %27 = dma.done [#allocation3], 256
    $region13: #{tpu_custom_call.1} parent=1 // pred_fallthru
      _
    %v28 = vld [vmem:[%s0] sm:$0xff]
    %v29 = vlaneseq
    %v30 = vand.u32 %v29, 127
    %31 = vset.pattern.permute.xlu0 0
    %32 = vperm.xlu0 %31, %v28
    %v33 = vpop.permute.xlu0 %32
    %vm34 = vcmp.eq.s32.totalorder %v30, %v33
    %v35 = vsel %vm34, 1, 0
    %v36 = vcvt.s32.f32 %v35
    %v37 = vld [vmem:[#allocation2] sm:$0xff]
    %v38 = vld [vmem:[#allocation2 + $0x8] sm:$0x7]
    %vm39 = vcmask 89088
    %v41 = vsel %vm39, %v36, 0
    %vm43 = vcmask 1042432
    %v45 = vsel %vm43, %v38, 0
    %47 = vmatpush.msra.mxu0 0.0
    %48 = vmatpush.msra.mxu0 0.0
    %49 = vmatpush.msra.mxu0 0.0
    %50 = vmatpush.msra.mxu0 0.0
    %51 = vmatpush.msra.mxu0 0.0
    %52 = vmatpush.msra.mxu0 0.0
    %53 = vmatpush.msra.mxu0 0.0
    %54 = vmatpush.msra.mxu0 0.0
    %55 = vmatpush.msra.mxu0 0.0
    %56 = vmatpush.msra.mxu0 0.0
    %57 = vmatpush.msra.mxu0 0.0
    %58 = vmatpush.msra.mxu0 0.0
    %59 = vmatpush.msra.mxu0 0.0
    %60 = vmatpush.msra.mxu0 0.0
    %v61 = vand.u32 %v45, 4294901760
    %62 = vmatpush.msra.mxu0 %v61
    %v63 = vand.u32 %v37, 4294901760
    %64 = vmatpush.msra.mxu0 %v63
    %v65 = vand.u32 %v41, 4294901760
    %v66 = vsub.f32 %v41, %v65
    %v67 = vand.u32 %v66, 4294901760
    %v68 = vsub.f32 %v66, %v67
    %v69 = vand.u32 %v68, 4294901760
    %70 = vmatmul.f32.gmra.mxu0 %v69
    %v71 = vpop.f32.mrf.mxu0
    %v72 = vadd.f32 0.0, %v71
    %73 = vdwg.mxu0
    %74 = vmatpush.msra.mxu0 0.0
    %75 = vmatpush.msra.mxu0 0.0
    %76 = vmatpush.msra.mxu0 0.0
    %77 = vmatpush.msra.mxu0 0.0
    %78 = vmatpush.msra.mxu0 0.0
    %79 = vmatpush.msra.mxu0 0.0
    %80 = vmatpush.msra.mxu0 0.0
    %81 = vmatpush.msra.mxu0 0.0
    %82 = vmatpush.msra.mxu0 0.0
    %83 = vmatpush.msra.mxu0 0.0
    %84 = vmatpush.msra.mxu0 0.0
    %85 = vmatpush.msra.mxu0 0.0
    %86 = vmatpush.msra.mxu0 0.0
    %87 = vmatpush.msra.mxu0 0.0
    %v88 = vand.u32 %v45, 4294901760
    %v89 = vsub.f32 %v45, %v88
    %v90 = vand.u32 %v89, 4294901760
    %v91 = vsub.f32 %v89, %v90
    %v92 = vand.u32 %v91, 4294901760
    %93 = vmatpush.msra.mxu0 %v92
    %v94 = vand.u32 %v37, 4294901760
    %v95 = vsub.f32 %v37, %v94
    %v96 = vand.u32 %v95, 4294901760
    %v97 = vsub.f32 %v95, %v96
    %v98 = vand.u32 %v97, 4294901760
    %99 = vmatpush.msra.mxu0 %v98
    %v100 = vand.u32 %v41, 4294901760
    %101 = vmatmul.f32.gmra.mxu0 %v100
    %v102 = vpop.f32.mrf.mxu0
    %v103 = vadd.f32 %v72, %v102
    %104 = vdwg.mxu0
    %105 = vmatpush.msra.mxu0 0.0
    %106 = vmatpush.msra.mxu0 0.0
    %107 = vmatpush.msra.mxu0 0.0
    %108 = vmatpush.msra.mxu0 0.0
    %109 = vmatpush.msra.mxu0 0.0
    %110 = vmatpush.msra.mxu0 0.0
    %111 = vmatpush.msra.mxu0 0.0
    %112 = vmatpush.msra.mxu0 0.0
    %113 = vmatpush.msra.mxu0 0.0
    %114 = vmatpush.msra.mxu0 0.0
    %115 = vmatpush.msra.mxu0 0.0
    %116 = vmatpush.msra.mxu0 0.0
    %117 = vmatpush.msra.mxu0 0.0
    %118 = vmatpush.msra.mxu0 0.0
    %v119 = vand.u32 %v45, 4294901760
    %v120 = vsub.f32 %v45, %v119
    %121 = vmatpush.msra.mxu0 %v120
    %v122 = vand.u32 %v37, 4294901760
    %v123 = vsub.f32 %v37, %v122
    %124 = vmatpush.msra.mxu0 %v123
    %v125 = vand.u32 %v41, 4294901760
    %v126 = vsub.f32 %v41, %v125
    %127 = vmatmul.f32.gmra.mxu0 %v126
    %v128 = vpop.f32.mrf.mxu0
    %v129 = vadd.f32 %v103, %v128
    %130 = vdwg.mxu0
    %131 = vmatpush.msra.mxu0 0.0
    %132 = vmatpush.msra.mxu0 0.0
    %133 = vmatpush.msra.mxu0 0.0
    %134 = vmatpush.msra.mxu0 0.0
    %135 = vmatpush.msra.mxu0 0.0
    %136 = vmatpush.msra.mxu0 0.0
    %137 = vmatpush.msra.mxu0 0.0
    %138 = vmatpush.msra.mxu0 0.0
    %139 = vmatpush.msra.mxu0 0.0
    %140 = vmatpush.msra.mxu0 0.0
    %141 = vmatpush.msra.mxu0 0.0
    %142 = vmatpush.msra.mxu0 0.0
    %143 = vmatpush.msra.mxu0 0.0
    %144 = vmatpush.msra.mxu0 0.0
    %v145 = vand.u32 %v45, 4294901760
    %146 = vmatpush.msra.mxu0 %v145
    %v147 = vand.u32 %v37, 4294901760
    %148 = vmatpush.msra.mxu0 %v147
    %v149 = vand.u32 %v41, 4294901760
    %v150 = vsub.f32 %v41, %v149
    %v151 = vand.u32 %v150, 4294901760
    %152 = vmatmul.f32.gmra.mxu0 %v151
    %v153 = vpop.f32.mrf.mxu0
    %v154 = vadd.f32 %v129, %v153
    %155 = vdwg.mxu0
    %156 = vmatpush.msra.mxu0 0.0
    %157 = vmatpush.msra.mxu0 0.0
    %158 = vmatpush.msra.mxu0 0.0
    %159 = vmatpush.msra.mxu0 0.0
    %160 = vmatpush.msra.mxu0 0.0
    %161 = vmatpush.msra.mxu0 0.0
    %162 = vmatpush.msra.mxu0 0.0
    %163 = vmatpush.msra.mxu0 0.0
    %164 = vmatpush.msra.mxu0 0.0
    %165 = vmatpush.msra.mxu0 0.0
    %166 = vmatpush.msra.mxu0 0.0
    %167 = vmatpush.msra.mxu0 0.0
    %168 = vmatpush.msra.mxu0 0.0
    %169 = vmatpush.msra.mxu0 0.0
    %v170 = vand.u32 %v45, 4294901760
    %v171 = vsub.f32 %v45, %v170
    %v172 = vand.u32 %v171, 4294901760
    %173 = vmatpush.msra.mxu0 %v172
    %v174 = vand.u32 %v37, 4294901760
    %v175 = vsub.f32 %v37, %v174
    %v176 = vand.u32 %v175, 4294901760
    %177 = vmatpush.msra.mxu0 %v176
    %v178 = vand.u32 %v41, 4294901760
    %179 = vmatmul.f32.gmra.mxu0 %v178
    %v180 = vpop.f32.mrf.mxu0
    %v181 = vadd.f32 %v154, %v180
    %182 = vdwg.mxu0
    %183 = vmatpush.msra.mxu0 0.0
    %184 = vmatpush.msra.mxu0 0.0
    %185 = vmatpush.msra.mxu0 0.0
    %186 = vmatpush.msra.mxu0 0.0
    %187 = vmatpush.msra.mxu0 0.0
    %188 = vmatpush.msra.mxu0 0.0
    %189 = vmatpush.msra.mxu0 0.0
    %190 = vmatpush.msra.mxu0 0.0
    %191 = vmatpush.msra.mxu0 0.0
    %192 = vmatpush.msra.mxu0 0.0
    %193 = vmatpush.msra.mxu0 0.0
    %194 = vmatpush.msra.mxu0 0.0
    %195 = vmatpush.msra.mxu0 0.0
    %196 = vmatpush.msra.mxu0 0.0
    %v197 = vand.u32 %v45, 4294901760
    %198 = vmatpush.msra.mxu0 %v197
    %v199 = vand.u32 %v37, 4294901760
    %200 = vmatpush.msra.mxu0 %v199
    %v201 = vand.u32 %v41, 4294901760
    %202 = vmatmul.f32.gmra.mxu0 %v201
    %v203 = vpop.f32.mrf.mxu0
    %v204 = vadd.f32 %v181, %v203
    %205 = vdwg.mxu0
    %206 = vst [vmem:[#allocation5] sm:$0xff] %v204
    // Predicated region
    $region14: #{tpu_custom_call.1} parent=1 // pred_check
      _
    $region15: #{tpu_custom_call.1} parent=1 // pred_check_branch
      %208 = sbr.rel (0) target = $region17
    $region16: #{tpu_custom_call.1} parent=1 // pred_region
      %210 = vsyncadd [#allocation4], 0
      %s212 = sshll.u32 [#allocation5], 4
      %s213 = int_to_ptr.vmem [resolvable:$true] %s212
      %s214 = sshll.u32 %s2, 4
      %s215 = int_to_ptr.hbm [resolvable:$true] %s214
      %217 = dma.vmem_to_hbm [thread:$0]  %s213, 128, %s215, [#allocation4]
    $region17: #{tpu_custom_call.1} parent=1 // pred_fallthru
      _
    // Predicated region
    $region18: #{tpu_custom_call.1} parent=1 // pred_check
      _
    $region19: #{tpu_custom_call.1} parent=1 // pred_check_branch
      %219 = sbr.rel (0) target = $region21
    $region20: #{tpu_custom_call.1} parent=1 // pred_region
      %221 = dma.done [#allocation4], 128
    $region21: #{tpu_custom_call.1} parent=1 // pred_fallthru
      _
    %222 = vsyncpa [#allocation3], 1
    %223 = vsyncpa [#allocation4], 1

</llo_original>
